<compile_context>
chip_gen: v6e
topology: v6e:2x2x1
jax: 0.10.0
libtpu: 0.0.40
codegen_flags: <defaults>
</compile_context>

<pallas_src>
import jax
import jax.numpy as jnp
from jax import lax
from jax.experimental import pallas as pl
from jax.experimental.pallas import tpu as pltpu


def _encoder_kernel(ids_ref, fused_ref, b_ref, out_ref):
    # ids_ref:   (B_tile*L, 1) int32  token ids for this batch tile (batch-major)
    # fused_ref: (Vp, H)       f32    embedding table pre-multiplied by W^T
    #                                 (row 0 == 0 handles padding_idx=0)
    # b_ref:     (1, H)        f32    linear bias
    # out_ref:   (B_tile, H)   f32    max-pooled sentence encodings for this tile
    BL = ids_ref.shape[0]
    Vp, H = fused_ref.shape
    Bt = out_ref.shape[0]
    L = BL // Bt

    ids = ids_ref[...]                                              # (BL, 1) int32
    iota = lax.broadcasted_iota(jnp.int32, (BL, Vp), 1)             # (BL, Vp)
    onehot = jnp.where(iota == ids, 1.0, 0.0).astype(jnp.float32)   # (BL, Vp)

    # Single fused embedding-gather + linear matmul on the MXU.
    y = jnp.dot(onehot, fused_ref[...],
                preferred_element_type=jnp.float32)                 # (BL, H)

    # Max-pool over the sequence axis per batch row; bias hoisted after the max;
    # one dense store of the whole (B_tile, H) output tile.
    y3 = y.reshape(Bt, L, H)
    out_ref[...] = jnp.max(y3, axis=1) + b_ref[...]                 # (Bt, H)


def prepare_params(embedding_table, linear_w, linear_b):
    """One-time parameter prep:
       - pad the vocab dim to a multiple of 128 with zero rows (never selected),
       - fold the Linear weight into the table: fused = table @ W^T
         (valid because the embedding lookup is linear: (onehot@T)@W == onehot@(T@W)),
       - reshape the bias to (1, H)."""
    V1, H = embedding_table.shape
    Vp = ((V1 + 127) // 128) * 128
    table_p = jnp.zeros((Vp, H), jnp.float32).at[:V1, :].set(
        jnp.asarray(embedding_table, jnp.float32))
    w_t = jnp.asarray(linear_w, jnp.float32).T                      # (in, out)
    fused = jnp.dot(table_p, w_t, precision=lax.Precision.HIGHEST)  # (Vp, H)
    b2 = jnp.asarray(linear_b, jnp.float32).reshape(1, H)
    return fused, b2


def sentence_encoder_forward(token_ids, fused_table, b2, *, b_tile=None):
    """token_ids: (B, L) int32; returns (B, H) float32 (matches the PyTorch forward).
    Token ids must lie in [0, vocab_size]; out-of-range ids would silently map to a
    zero embedding instead of raising like nn.Embedding (checked in the caller)."""
    B, L = token_ids.shape
    Vp, H = fused_table.shape
    if b_tile is None:
        b_tile = B if B <= 8 else 8
    assert B % b_tile == 0, "batch must be divisible by the batch tile"
    grid = (B // b_tile,)
    ids2 = token_ids.reshape(B * L, 1).astype(jnp.int32)
    return pl.pallas_call(
        _encoder_kernel,
        out_shape=jax.ShapeDtypeStruct((B, H), jnp.float32),
        grid=grid,
        in_specs=[
            pl.BlockSpec((b_tile * L, 1), lambda i: (i, 0)),  # ids tile (moves)
            pl.BlockSpec((Vp, H), lambda i: (0, 0)),          # fused table (resident)
            pl.BlockSpec((1, H), lambda i: (0, 0)),           # bias (resident)
        ],
        out_specs=pl.BlockSpec((b_tile, H), lambda i: (i, 0)),
        compiler_params=pltpu.CompilerParams(
            dimension_semantics=("parallel",)),                # v7x: 2 TCs split batch
    )(ids2, fused_table, b2)


if __name__ == "__main__":
    # config: hidden_size=32, vocab_size=30 (+1 for padding), max_length=8, batch=2
    B, L, H, V = 2, 8, 32, 30

    key = jax.random.PRNGKey(0)
    k_emb, k_w, k_b, k_ids = jax.random.split(key, 4)

    # Deterministic synthetic parameters (not a checkpoint).
    embedding_table = jax.random.normal(k_emb, (V + 1, H), dtype=jnp.float32) * 0.1
    embedding_table = embedding_table.at[0].set(0.0)      # padding_idx=0 -> zero row
    linear_w = jax.random.normal(k_w, (H, H), dtype=jnp.float32) * 0.1  # (out, in)
    linear_b = jax.random.normal(k_b, (H,), dtype=jnp.float32) * 0.1

    # Example token ids (include some padding zeros).
    token_ids = jax.random.randint(k_ids, (B, L), 0, V + 1, dtype=jnp.int32)
    token_ids = token_ids.at[:, -2:].set(0)
    assert int(jnp.max(token_ids)) <= V, "token id out of embedding range"

    fused_table, b2 = prepare_params(embedding_table, linear_w, linear_b)
    out = sentence_encoder_forward(token_ids, fused_table, b2)
    out = jax.block_until_ready(out)

    # Pure-JAX reference (matches the PyTorch module's forward; dropout is unused there).
    emb_ref = jnp.take(embedding_table, token_ids, axis=0)            # (B, L, H)
    lin_ref = jnp.matmul(emb_ref, linear_w.T,
                         precision=lax.Precision.HIGHEST) + linear_b  # (B, L, H)
    ref = jnp.max(lin_ref, axis=1)                                    # (B, H)
    assert out.shape == (B, H)
    assert jnp.allclose(out, ref, atol=1e-5), "mismatch vs reference"

    print("KERNEL_OK")
</pallas_src>

<mosaic_0001>
module attributes {stable_mosaic.version = 11 : i64} {
  func.func @_encoder_kernel(%arg0: i32, %arg1: memref<16x1xi32, #tpu.memory_space<vmem>>, %arg2: memref<128x32xf32, #tpu.memory_space<vmem>>, %arg3: memref<1x32xf32, #tpu.memory_space<vmem>>, %arg4: memref<2x32xf32, #tpu.memory_space<vmem>>) attributes {dimension_semantics = [#tpu.dimension_semantics<parallel>], iteration_bounds = array<i64: 1>, scalar_prefetch = 0 : i64, scratch_operands = 0 : i64, tpu.core_type = #tpu.core_type<tc>, window_params = [{transform_indices = @transform_0, window_bounds = array<i64: 16, 1>}, {pipeline_mode = #tpu.pipeline_mode<synchronous>, transform_indices = @transform_1, window_bounds = array<i64: 128, 32>}, {pipeline_mode = #tpu.pipeline_mode<synchronous>, transform_indices = @transform_2, window_bounds = array<i64: 1, 32>}, {transform_indices = @transform_3, window_bounds = array<i64: 2, 32>}]} {
    %c0 = arith.constant 0 : index
    %c0_0 = arith.constant 0 : index
    %0 = vector.load %arg1[%c0, %c0_0] : memref<16x1xi32, #tpu.memory_space<vmem>>, vector<16x1xi32>
    %1 = tpu.iota {dimensions = array<i32: 1>} : vector<16x128xi32>
    %2 = vector.broadcast %0 : vector<16x1xi32> to vector<16x128xi32>
    %3 = arith.cmpi eq, %1, %2 : vector<16x128xi32>
    %cst = arith.constant 1.000000e+00 : f32
    %cst_1 = arith.constant 0.000000e+00 : f32
    %4 = vector.broadcast %cst : f32 to vector<16x128xf32>
    %5 = vector.broadcast %cst_1 : f32 to vector<16x128xf32>
    %6 = arith.select %3, %4, %5 : vector<16x128xi1>, vector<16x128xf32>
    %c0_2 = arith.constant 0 : index
    %c0_3 = arith.constant 0 : index
    %7 = vector.load %arg2[%c0_2, %c0_3] : memref<128x32xf32, #tpu.memory_space<vmem>>, vector<128x32xf32>
    %cst_4 = arith.constant dense<0.000000e+00> : vector<16x32xf32>
    %8 = tpu.matmul %6, %7, %cst_4 {dimension_numbers = #tpu.dot_dimension_numbers<[1], [0], [0], [1], [0, 0, 1, 1], [], []>} : vector<16x128xf32>, vector<128x32xf32>, vector<16x32xf32> -> vector<16x32xf32>
    %9 = vector.shape_cast %8 : vector<16x32xf32> to vector<2x8x32xf32>
    %cst_5 = arith.constant dense<0xFF800000> : vector<2x32xf32>
    %10 = vector.multi_reduction <maximumf>, %9, %cst_5 [1] : vector<2x8x32xf32> to vector<2x32xf32>
    %c0_6 = arith.constant 0 : index
    %c0_7 = arith.constant 0 : index
    %11 = vector.load %arg3[%c0_6, %c0_7] : memref<1x32xf32, #tpu.memory_space<vmem>>, vector<1x32xf32>
    %12 = vector.broadcast %11 : vector<1x32xf32> to vector<2x32xf32>
    %13 = arith.addf %10, %12 : vector<2x32xf32>
    %c0_8 = arith.constant 0 : index
    %c0_9 = arith.constant 0 : index
    %14 = vector.load %arg4[%c0_8, %c0_9] : memref<2x32xf32, #tpu.memory_space<vmem>>, vector<2x32xf32>
    tpu.vector_store %arg4[%c0_8, %c0_9], %13 {strides = array<i32>} : memref<2x32xf32, #tpu.memory_space<vmem>>, vector<2x32xf32>,
    return
  }
  func.func @transform_0(%arg0: i32) -> (i32, i32) {
    %c0_i32 = arith.constant 0 : i32
    %c0_i32_0 = arith.constant 0 : i32
    return %arg0, %c0_i32 : i32, i32
  }
  func.func @transform_1(%arg0: i32) -> (i32, i32) {
    %c0_i32 = arith.constant 0 : i32
    %c0_i32_0 = arith.constant 0 : i32
    %c0_i32_1 = arith.constant 0 : i32
    return %c0_i32, %c0_i32_0 : i32, i32
  }
  func.func @transform_2(%arg0: i32) -> (i32, i32) {
    %c0_i32 = arith.constant 0 : i32
    %c0_i32_0 = arith.constant 0 : i32
    %c0_i32_1 = arith.constant 0 : i32
    return %c0_i32, %c0_i32_0 : i32, i32
  }
  func.func @transform_3(%arg0: i32) -> (i32, i32) {
    %c0_i32 = arith.constant 0 : i32
    %c0_i32_0 = arith.constant 0 : i32
    return %arg0, %c0_i32 : i32, i32
  }
}

</mosaic_0001>

<llo_original>
// kernel: tpu_custom_call.1
$region0: #{tpu_custom_call.1}
  #allocation0 [shape = 'u32[]', space=smem, size = 0x4, offset = 0x4, fixed_abs, tag = 'smem constant byte address 0x4 - core index']
  #allocation1 [shape = 'u32[144,128]{1,0:T(1,128)}', space=vmem, size = 0x12000, scoped, tag = 'internal scratch']
  %s0 = inlined_call_operand.vmem [shape: s32[16,1], index: 0, kind: input, shape index: {}]
  %s1 = inlined_call_operand.vmem [shape: f32[128,32], index: 1, kind: input, shape index: {}]
  %s2 = inlined_call_operand.vmem [shape: f32[1,32], index: 2, kind: input, shape index: {}]
  %s3 = inlined_call_operand.hbm [shape: f32[2,32], index: 3, kind: output, shape index: {}]
  %s4 = sld [smem:[#allocation0]]
  $region22: #{tpu_custom_call.1} parent=0
    _
  %s6 = ssub.s32 1, %s4
  %s7 = scalar_select 0, %s6, %s4
  $region1: #{tpu_custom_call.1} parent=0
    #allocation2 [shape = 'u8[1024]{0}', space=vmem, size = 0x400, scoped, tag = 'output window, operand 0, single buffered']
    #allocation3 [shape = 's32[1]{0}', space=sflag, size = 0x4, scoped, tag = 'scoped memory for tpu_custom_call.1']
    %8 = vsyncpa [#allocation3], 0
    // Predicated region
    $region2: #{tpu_custom_call.1} parent=1 // pred_check
      _
    $region3: #{tpu_custom_call.1} parent=1 // pred_check_branch
      %10 = sbr.rel (0) target = $region5
    $region4: #{tpu_custom_call.1} parent=1 // pred_region
      _
    $region5: #{tpu_custom_call.1} parent=1 // pred_fallthru
      _
    // Predicated region
    $region6: #{tpu_custom_call.1} parent=1 // pred_check
      _
    $region7: #{tpu_custom_call.1} parent=1 // pred_check_branch
      %12 = sbr.rel (0) target = $region9
    $region8: #{tpu_custom_call.1} parent=1 // pred_region
      _
    $region9: #{tpu_custom_call.1} parent=1 // pred_fallthru
      _
    // Predicated region
    $region10: #{tpu_custom_call.1} parent=1 // pred_check
      _
    $region11: #{tpu_custom_call.1} parent=1 // pred_check_branch
      %14 = sbr.rel (0) target = $region13
    $region12: #{tpu_custom_call.1} parent=1 // pred_region
      _
    $region13: #{tpu_custom_call.1} parent=1 // pred_fallthru
      _
    %v15 = vld [vmem:[%s0] sm:$0xff]
    %v16 = vld [vmem:[%s0 + $0x8] sm:$0xff]
    %v17 = vlaneseq
    %v18 = vand.u32 %v17, 127
    %19 = vset.pattern.permute.xlu0 0
    %20 = vperm.xlu0 %19, %v15
    %v21 = vpop.permute.xlu0 %20
    %22 = vset.pattern.permute.xlu0 0
    %23 = vperm.xlu0 %22, %v16
    %v24 = vpop.permute.xlu0 %23
    %vm25 = vcmp.eq.s32.totalorder %v18, %v21
    %vm26 = vcmp.eq.s32.totalorder %v18, %v24
    %v27 = vsel %vm25, 1.0, 0.0
    %v28 = vsel %vm26, 1.0, 0.0
    %v29 = vld [vmem:[%s1] sm:$0xff]
    %v30 = vld [vmem:[%s1 + $0x8] sm:$0xff]
    %v31 = vld [vmem:[%s1 + $0x10] sm:$0xff]
    %v32 = vld [vmem:[%s1 + $0x18] sm:$0xff]
    %v33 = vld [vmem:[%s1 + $0x20] sm:$0xff]
    %v34 = vld [vmem:[%s1 + $0x28] sm:$0xff]
    %v35 = vld [vmem:[%s1 + $0x30] sm:$0xff]
    %v36 = vld [vmem:[%s1 + $0x38] sm:$0xff]
    %v37 = vld [vmem:[%s1 + $0x40] sm:$0xff]
    %v38 = vld [vmem:[%s1 + $0x48] sm:$0xff]
    %v39 = vld [vmem:[%s1 + $0x50] sm:$0xff]
    %v40 = vld [vmem:[%s1 + $0x58] sm:$0xff]
    %v41 = vld [vmem:[%s1 + $0x60] sm:$0xff]
    %v42 = vld [vmem:[%s1 + $0x68] sm:$0xff]
    %v43 = vld [vmem:[%s1 + $0x70] sm:$0xff]
    %v44 = vld [vmem:[%s1 + $0x78] sm:$0xff]
    %45 = vmatprep.subr.mxu0 0.0
    %46 = vmatpush1.msra.mxu0 %v44
    %47 = vmatprep.subr.mxu0 0.0
    %48 = vmatpush1.msra.mxu0 %v43
    %49 = vmatprep.subr.mxu0 0.0
    %50 = vmatpush1.msra.mxu0 %v42
    %51 = vmatprep.subr.mxu0 0.0
    %52 = vmatpush1.msra.mxu0 %v41
    %53 = vmatprep.subr.mxu0 0.0
    %54 = vmatpush1.msra.mxu0 %v40
    %55 = vmatprep.subr.mxu0 0.0
    %56 = vmatpush1.msra.mxu0 %v39
    %57 = vmatprep.subr.mxu0 0.0
    %58 = vmatpush1.msra.mxu0 %v38
    %59 = vmatprep.subr.mxu0 0.0
    %60 = vmatpush1.msra.mxu0 %v37
    %61 = vmatprep.subr.mxu0 0.0
    %62 = vmatpush1.msra.mxu0 %v36
    %63 = vmatprep.subr.mxu0 0.0
    %64 = vmatpush1.msra.mxu0 %v35
    %65 = vmatprep.subr.mxu0 0.0
    %66 = vmatpush1.msra.mxu0 %v34
    %67 = vmatprep.subr.mxu0 0.0
    %68 = vmatpush1.msra.mxu0 %v33
    %69 = vmatprep.subr.mxu0 0.0
    %70 = vmatpush1.msra.mxu0 %v32
    %71 = vmatprep.subr.mxu0 0.0
    %72 = vmatpush1.msra.mxu0 %v31
    %73 = vmatprep.subr.mxu0 0.0
    %74 = vmatpush1.msra.mxu0 %v30
    %75 = vmatprep.subr.mxu0 0.0
    %76 = vmatpush1.msra.mxu0 %v29
    %77 = vmatprep.subr.mxu0 0.0
    %78 = vmatpush2.msra.mxu0 0.0
    %79 = vmatprep.subr.mxu0 0.0
    %80 = vmatpush2.msra.mxu0 0.0
    %81 = vmatprep.subr.mxu0 0.0
    %82 = vmatpush2.msra.mxu0 0.0
    %83 = vmatprep.subr.mxu0 0.0
    %84 = vmatpush2.msra.mxu0 0.0
    %85 = vmatprep.subr.mxu0 0.0
    %86 = vmatpush2.msra.mxu0 0.0
    %87 = vmatprep.subr.mxu0 0.0
    %88 = vmatpush2.msra.mxu0 0.0
    %89 = vmatprep.subr.mxu0 0.0
    %90 = vmatpush2.msra.mxu0 0.0
    %91 = vmatprep.subr.mxu0 0.0
    %92 = vmatpush2.msra.mxu0 0.0
    %93 = vmatprep.subr.mxu0 0.0
    %94 = vmatpush2.msra.mxu0 0.0
    %95 = vmatprep.subr.mxu0 0.0
    %96 = vmatpush2.msra.mxu0 0.0
    %97 = vmatprep.subr.mxu0 0.0
    %98 = vmatpush2.msra.mxu0 0.0
    %99 = vmatprep.subr.mxu0 0.0
    %100 = vmatpush2.msra.mxu0 0.0
    %101 = vmatprep.subr.mxu0 0.0
    %102 = vmatpush2.msra.mxu0 0.0
    %103 = vmatprep.subr.mxu0 0.0
    %104 = vmatpush2.msra.mxu0 0.0
    %105 = vmatprep.subr.mxu0 0.0
    %106 = vmatpush2.msra.mxu0 0.0
    %107 = vmatprep.subr.mxu0 0.0
    %108 = vmatpush2.msra.mxu0 0.0
    %109 = vmatprep.mubr.f32.mxu0 0.0
    %110 = vmatmul.mubr.f32.gmra.mxu0 %v27
    %v111 = vpop.f32.mrf.mxu0
    %v112 = vadd.f32 0.0, %v111
    %v113 = vpop.f32.mrf.mxu0
    %114 = vmatprep.mubr.f32.mxu0 0.0
    %115 = vmatmul.mubr.f32.gmra.mxu0 %v28
    %v116 = vpop.f32.mrf.mxu0
    %v117 = vadd.f32 0.0, %v116
    %v118 = vpop.f32.mrf.mxu0
    %119 = vdwg.mxu0
    %vm120 = vcmask 261120
    %v121 = vsel %vm120, %v112, -inf
    %v122 = vrot.slane %v121, 4
    %v123 = vmax.f32 %v121, %v122
    %v124 = vrot.slane %v123, 2
    %v125 = vmax.f32 %v123, %v124
    %v126 = vrot.slane %v125, 1
    %v127 = vmax.f32 %v125, %v126
    %v128 = vsel %vm120, %v117, -inf
    %v129 = vrot.slane %v128, 4
    %v130 = vmax.f32 %v128, %v129
    %v131 = vrot.slane %v130, 2
    %v132 = vmax.f32 %v130, %v131
    %v133 = vrot.slane %v132, 1
    %v134 = vmax.f32 %v132, %v133
    %v135 = vld [vmem:[%s2] sm:$0x1]
    %v137 = vlaneseq
    %v138 = vshrl.u32 %v137, 7
    %v139 = vsub.s32 0, %v138
    %v140 = vrot.slane %v135, %v139
    %v142 = vadd.f32 %v127, %v140
    %v143 = vadd.f32 %v134, %v140
    %v146 = vrot.slane %v143, 7
    %vm147 = vcmask 1041409
    %v148 = vsel %vm147, %v146, %v142
    %vm150 = vcmask 254976
    %151 = vst.msk [vmem:[#allocation2] sm:$0x3] %vm150, %v148
    // Predicated region
    $region14: #{tpu_custom_call.1} parent=1 // pred_check
      _
    $region15: #{tpu_custom_call.1} parent=1 // pred_check_branch
      %153 = sbr.rel (0) target = $region17
    $region16: #{tpu_custom_call.1} parent=1 // pred_region
      %s155 = ssub.s32 32, 32
      %156 = vsyncadd [#allocation3], %s155
      %s158 = sshll.u32 [#allocation2], 4
      %s159 = int_to_ptr.vmem [resolvable:$true] %s158
      %161 = dma.vmem_to_hbm [thread:$0]  %s159, 32, %s3, [#allocation3]
    $region17: #{tpu_custom_call.1} parent=1 // pred_fallthru
      _
    // Predicated region
    $region18: #{tpu_custom_call.1} parent=1 // pred_check
      _
    $region19: #{tpu_custom_call.1} parent=1 // pred_check_branch
      %163 = sbr.rel (0) target = $region21
    $region20: #{tpu_custom_call.1} parent=1 // pred_region
      %164 = dma.done [#allocation3], 32
    $region21: #{tpu_custom_call.1} parent=1 // pred_fallthru
      _
    %165 = vsyncpa [#allocation3], 1

</llo_original>
